<compile_context>
chip_gen: v7x
topology: tpu7x:2x2x1
jax: 0.10.0
libtpu: 0.0.40
codegen_flags: <defaults>
</compile_context>

<pallas_src>
import functools

import numpy as np
import jax
import jax.numpy as jnp
from jax import lax
from jax.experimental import pallas as pl
from jax.experimental.pallas import tpu as pltpu

L = 512
D = 256
K_ATT = 1
NUM_CLASSES = 3
POOL_HW = 30
_BN_EPS = 1e-5
RESNET_CFG = [(64, 64, 1), (64, 128, 2), (128, 256, 2), (256, 512, 2)]


# ----------------------------------------------------------------------------
# Generation-conditional sizing (v5e/v6e: 128 MiB VMEM, v7x: 64 MiB per TC)
# ----------------------------------------------------------------------------
def _phys_vmem_bytes():
    try:
        info = pltpu.get_tpu_info()
        v = getattr(info, "vmem_capacity_bytes", None)
        if v:
            return int(v)
    except Exception:
        pass
    return 64 * 1024 * 1024        # conservative (v7x-sized) fallback


_PHYS_VMEM = _phys_vmem_bytes()
_BIG_VMEM = _PHYS_VMEM >= 100 * 1024 * 1024
_TM_CAP = 1024 if _BIG_VMEM else 512
_TN_CAP = 256                       # N=512 -> 2x256: both v7x TensorCores get work
_TK_CAP = 6400                      # fc1 weight block ~3.1 MiB bf16, streamed Buffered(3)
_VMEM_LIMIT = min(int(_PHYS_VMEM * 3 // 4), 96 * 1024 * 1024)


# ----------------------------------------------------------------------------
# Pallas kernels
# ----------------------------------------------------------------------------
def _matmul_kernel_single(x_ref, w_ref, b_ref, o_ref, *, act):
    """Single K step: write act(dot + bias) directly (no zero-init / re-read epilogue)."""
    r = jnp.dot(x_ref[...], w_ref[...], preferred_element_type=jnp.float32) + b_ref[...]
    if act == "relu":
        r = jnp.maximum(r, 0.0)
    elif act == "tanh":
        r = jnp.tanh(r)
    o_ref[...] = r.astype(o_ref.dtype)


def _matmul_kernel_multi(x_ref, w_ref, b_ref, o_ref, acc_ref, *, act):
    """Multi K step: accumulate in an f32 VMEM scratch, bias/act/cast on the final step."""
    @pl.when(pl.program_id(2) == 0)
    def _():
        acc_ref[...] = jnp.zeros_like(acc_ref)

    acc_ref[...] += jnp.dot(x_ref[...], w_ref[...], preferred_element_type=jnp.float32)

    @pl.when(pl.program_id(2) == pl.num_programs(2) - 1)
    def _():
        r = acc_ref[...] + b_ref[...]
        if act == "relu":
            r = jnp.maximum(r, 0.0)
        elif act == "tanh":
            r = jnp.tanh(r)
        o_ref[...] = r.astype(o_ref.dtype)


def _conv3x3_kernel(x_ref, w_ref, b_ref, o_ref, acc_ref, *, Wp, M, Cin, act):
    """Fused 3x3 / stride-1 / pad-1 conv for one image: the 9 taps are contiguous row-shifted
    windows of the flattened padded plane (rows = padded-width grid; cols >= W discarded)."""
    for t in range(9):
        i, j = divmod(t, 3)
        xt = x_ref[pl.ds(i * Wp + j, M), :]            # (M, Cin) shifted window, no HBM im2col
        wt = w_ref[pl.ds(t * Cin, Cin), :]             # (Cin, Cout_tile) tap weights
        p = jnp.dot(xt, wt, preferred_element_type=jnp.float32)
        if t == 0:
            acc_ref[...] = p
        else:
            acc_ref[...] += p
    r = acc_ref[...] + b_ref[...]
    if act == "relu":
        r = jnp.maximum(r, 0.0)
    elif act == "tanh":
        r = jnp.tanh(r)
    o_ref[...] = r.astype(o_ref.dtype)


def _attention_tail_kernel(h_ref, w1_ref, b1_ref, w2t_ref, b2_ref, wc_ref, bc_ref,
                           logits_ref, probs_ref, a_ref):
    """Fused MIL attention tail for one bag (grid over batch):
       att1(tanh) -> att2 -> softmax(bag, T=0.5) -> weighted sum -> classifier -> softmax."""
    hb = h_ref[0]                                                       # (bag, L) bf16
    a1 = jnp.tanh(jnp.dot(hb, w1_ref[...],
                          preferred_element_type=jnp.float32) + b1_ref[...])   # (bag, D)
    # att2 has a single output unit (K=1): VPU reduction against the transposed weight row.
    sc = jnp.sum(a1 * w2t_ref[...], axis=-1, keepdims=True) + b2_ref[...]       # (bag, 1)
    sc = sc * 2.0                                                       # / temperature 0.5
    m = jnp.max(sc, axis=0, keepdims=True)
    e = jnp.exp(sc - m)
    att = e / jnp.sum(e, axis=0, keepdims=True)                         # (bag, 1), exact
    a_ref[0] = att

    mvec = jnp.sum(att * hb.astype(jnp.float32), axis=0, keepdims=True)  # (1, L) == A @ H
    lg = jnp.dot(mvec, wc_ref[...],
                 preferred_element_type=jnp.float32) + bc_ref[...]      # (1, C)
    logits_ref[0] = lg
    lm = jnp.max(lg, axis=-1, keepdims=True)
    le = jnp.exp(lg - lm)
    probs_ref[0] = le / jnp.sum(le, axis=-1, keepdims=True)             # log_softmax().exp()


# ----------------------------------------------------------------------------
# Pallas wrappers
# ----------------------------------------------------------------------------
def _pick_tile(dim, align, max_tile):
    """Largest divisor of `dim` that is a multiple of `align` and <= max_tile (or full dim).
    M is pre-padded to a multiple of 8 and K to a multiple of 128 by the callers, so the
    unaligned fallback (full-dim block) is never hit for this model's shapes."""
    if dim <= max_tile:
        return dim
    start = max_tile - (max_tile % align)
    for t in range(start, 0, -align):
        if dim % t == 0:
            return t
    return dim


def matmul_pallas(x, w, b, act=None, out_dtype=jnp.float32):
    """act(x @ w + b); bf16 operands, f32 accumulation/epilogue; x:(M,K) w:(K,N) b:(N,)."""
    x = x.astype(jnp.bfloat16)
    w = w.astype(jnp.bfloat16)
    M0, K = x.shape
    K2, N = w.shape
    assert K == K2
    # Pad M to a sublane multiple and K to a lane multiple so every block is aligned.
    M = M0
    if M % 8:
        mp = (-M) % 8
        x = jnp.pad(x, ((0, mp), (0, 0)))
        M += mp
    if K % 128:
        kp = (-K) % 128
        x = jnp.pad(x, ((0, 0), (0, kp)))
        w = jnp.pad(w, ((0, kp), (0, 0)))
        K += kp
    b2 = b.reshape(1, N).astype(jnp.float32)

    tm = _pick_tile(M, 8, _TM_CAP)
    tn = _pick_tile(N, 128, _TN_CAP)
    tk = _pick_tile(K, 128, _TK_CAP)
    kt = K // tk
    weight_streaming = N >= M          # weight bytes >= activation bytes

    if kt == 1:
        # Single K step: grid (cout, rows). The weight block index is constant across the
        # inner rows axis, so Mosaic skips the redundant weight DMA (weight residency).
        kernel = functools.partial(_matmul_kernel_single, act=act)
        grid = (N // tn, M // tm)
        in_specs = [
            pl.BlockSpec((tm, tk), lambda j, i: (i, 0)),
            pl.BlockSpec((tk, tn), lambda j, i: (0, j)),
            pl.BlockSpec((1, tn), lambda j, i: (0, j)),
        ]
        out_specs = pl.BlockSpec((tm, tn), lambda j, i: (i, j))
        scratch = []
        dims = ("parallel", "parallel")
    else:
        # Multi K step (fc1): K-last reduction, deep-buffered weight stream.
        kernel = functools.partial(_matmul_kernel_multi, act=act)
        if weight_streaming:
            w_spec = pl.BlockSpec((tk, tn), lambda i, j, k: (k, j),
                                  pipeline_mode=pl.Buffered(3))
        else:
            w_spec = pl.BlockSpec((tk, tn), lambda i, j, k: (k, j))
        grid = (M // tm, N // tn, kt)
        in_specs = [
            pl.BlockSpec((tm, tk), lambda i, j, k: (i, k)),
            w_spec,
            pl.BlockSpec((1, tn), lambda i, j, k: (0, j)),
        ]
        out_specs = pl.BlockSpec((tm, tn), lambda i, j, k: (i, j))
        scratch = [pltpu.VMEM((tm, tn), jnp.float32)]
        dims = ("parallel", "parallel", "arbitrary")

    out = pl.pallas_call(
        kernel,
        out_shape=jax.ShapeDtypeStruct((M, N), out_dtype),
        grid_spec=pltpu.PrefetchScalarGridSpec(
            num_scalar_prefetch=0, grid=grid,
            in_specs=in_specs, out_specs=out_specs, scratch_shapes=scratch),
        compiler_params=pltpu.CompilerParams(
            dimension_semantics=dims, vmem_limit_bytes=_VMEM_LIMIT),
    )(x, w, b2)
    if M != M0:
        out = out[:M0]
    return out


def conv3x3s1_pallas(x, w2, b, act, out_dtype=jnp.bfloat16):
    """Fused 3x3/stride-1/pad-1 NHWC conv.  The padded plane is flattened (free reshape) and
    each tap is a contiguous row-shifted window inside the kernel -- no HBM im2col tensor.
    Output is computed on a (H, W+2) grid; the two garbage columns are sliced off after."""
    N, H, W, Cin = x.shape
    Cout = w2.shape[-1]
    Wp = W + 2
    Hp = H + 3            # one extra bottom pad row keeps the largest tap shift in-bounds
    M = H * Wp
    xp = jnp.pad(x.astype(jnp.bfloat16), ((0, 0), (1, 2), (1, 1), (0, 0)))
    xf = xp.reshape(N, Hp * Wp, Cin)
    tn = _pick_tile(Cout, 128, _TN_CAP)
    b2 = b.reshape(1, Cout).astype(jnp.float32)

    kernel = functools.partial(_conv3x3_kernel, Wp=Wp, M=M, Cin=Cin, act=act)
    out = pl.pallas_call(
        kernel,
        out_shape=jax.ShapeDtypeStruct((N, M, Cout), out_dtype),
        grid_spec=pltpu.PrefetchScalarGridSpec(
            num_scalar_prefetch=0,
            grid=(Cout // tn, N),       # cout outer -> weight DMA'd once per cout tile
            in_specs=[
                pl.BlockSpec((None, Hp * Wp, Cin), lambda c, n: (n, 0, 0)),
                pl.BlockSpec((9 * Cin, tn), lambda c, n: (0, c)),
                pl.BlockSpec((1, tn), lambda c, n: (0, c)),
            ],
            out_specs=pl.BlockSpec((None, M, tn), lambda c, n: (n, 0, c)),
            scratch_shapes=[pltpu.VMEM((M, tn), jnp.float32)]),
        compiler_params=pltpu.CompilerParams(
            dimension_semantics=("parallel", "parallel"),
            vmem_limit_bytes=_VMEM_LIMIT),
    )(xf, w2, b2)
    return out.reshape(N, H, Wp, Cout)[:, :, :W, :]


def conv2d_pallas(x, w2, b, kh, kw, stride, padding, act, out_dtype=jnp.bfloat16):
    """NHWC conv (PyTorch semantics).  3x3/s1/p1 uses the fused in-kernel im2col; the few
    remaining convs (7x7 s2 stem, 3x3 s2, 1x1 s2 downsamples) keep the small im2col+matmul
    path.  w2: (kh*kw*Cin, Cout) bf16 with rows in (kh, kw, cin) order."""
    if kh == 3 and kw == 3 and stride == 1 and padding == 1:
        return conv3x3s1_pallas(x, w2, b, act, out_dtype)

    N, H, W, Cin = x.shape
    Cout = w2.shape[-1]
    Ho = (H + 2 * padding - kh) // stride + 1
    Wo = (W + 2 * padding - kw) // stride + 1
    xp = x if padding == 0 else jnp.pad(
        x, ((0, 0), (padding, padding), (padding, padding), (0, 0)))
    cols = []
    for i in range(kh):
        for j in range(kw):
            cols.append(lax.slice(
                xp,
                (0, i, j, 0),
                (N, i + stride * (Ho - 1) + 1, j + stride * (Wo - 1) + 1, Cin),
                (1, stride, stride, 1)))
    patches = jnp.concatenate(cols, axis=-1).reshape(N * Ho * Wo, kh * kw * Cin)
    out = matmul_pallas(patches, w2, b, act=act, out_dtype=out_dtype)
    return out.reshape(N, Ho, Wo, Cout)


def attention_tail_pallas(h, p, B, bag):
    """Fused attention tail: one pallas_call over the batch."""
    Lf = h.shape[-1]
    Dd = p["att1_w"].shape[-1]
    C = p["cls_b"].shape[-1]
    h3 = h.reshape(B, bag, Lf).astype(jnp.bfloat16)
    logits3, probs3, a3 = pl.pallas_call(
        _attention_tail_kernel,
        out_shape=(jax.ShapeDtypeStruct((B, 1, C), jnp.float32),
                   jax.ShapeDtypeStruct((B, 1, C), jnp.float32),
                   jax.ShapeDtypeStruct((B, bag, 1), jnp.float32)),
        grid_spec=pltpu.PrefetchScalarGridSpec(
            num_scalar_prefetch=0,
            grid=(B,),
            in_specs=[
                pl.BlockSpec((1, bag, Lf), lambda b: (b, 0, 0)),
                pl.BlockSpec((Lf, Dd), lambda b: (0, 0)),
                pl.BlockSpec((1, Dd), lambda b: (0, 0)),
                pl.BlockSpec((1, Dd), lambda b: (0, 0)),
                pl.BlockSpec((1, 1), lambda b: (0, 0)),
                pl.BlockSpec((Lf, C), lambda b: (0, 0)),
                pl.BlockSpec((1, C), lambda b: (0, 0)),
            ],
            out_specs=(pl.BlockSpec((1, 1, C), lambda b: (b, 0, 0)),
                       pl.BlockSpec((1, 1, C), lambda b: (b, 0, 0)),
                       pl.BlockSpec((1, bag, 1), lambda b: (b, 0, 0))),
        ),
        compiler_params=pltpu.CompilerParams(
            dimension_semantics=("parallel",), vmem_limit_bytes=_VMEM_LIMIT),
    )(h3, p["att1_w"], p["att1_b"], p["att2_wt"], p["att2_b"], p["cls_w"], p["cls_b"])
    # Mirrors torch: A.view(B, bag, K).transpose(1, 2)
    A = a3.reshape(B, bag, K_ATT).transpose(0, 2, 1)
    return logits3.reshape(B, C), probs3.reshape(B, C), A


# ----------------------------------------------------------------------------
# Pooling (tiny -> left to XLA)
# ----------------------------------------------------------------------------
def _pool_matrix(in_size, out_size):
    P = np.zeros((out_size, in_size), dtype=np.float32)
    for i in range(out_size):
        s = (i * in_size) // out_size
        e = -((-(i + 1) * in_size) // out_size)             # ceil
        P[i, s:e] = 1.0 / (e - s)
    return jnp.asarray(P)


def adaptive_avg_pool_nhwc(x, out_h, out_w):
    """AdaptiveAvgPool2d((out_h, out_w)) with exact torch bins."""
    N, h, w, C = x.shape
    Ph = _pool_matrix(h, out_h)
    Pw = _pool_matrix(w, out_w)
    y = jnp.einsum('nhwc,oh->nowc', x.astype(jnp.float32), Ph)
    y = jnp.einsum('nowc,pw->nopc', y, Pw)
    return y.astype(jnp.bfloat16)


# ----------------------------------------------------------------------------
# Deterministic parameter construction (PyTorch layout) + kernel-layout preparation
# ----------------------------------------------------------------------------
class KeyGen:
    def __init__(self, seed=0):
        self.key = jax.random.PRNGKey(seed)

    def __call__(self):
        self.key, sub = jax.random.split(self.key)
        return sub


def conv_init(kg, cout, cin, k):
    std = (2.0 / (cin * k * k)) ** 0.5
    return jax.random.normal(kg(), (cout, cin, k, k), jnp.float32) * std


def bias_init(kg, n, fan_in):
    return jax.random.normal(kg(), (n,), jnp.float32) * (1.0 / fan_in) ** 0.5


def linear_init(kg, fin, fout):
    std = (1.0 / fin) ** 0.5
    w = jax.random.normal(kg(), (fin, fout), jnp.float32) * std
    b = jax.random.normal(kg(), (fout,), jnp.float32) * std
    return w, b


def fold_bn(w):
    # BatchNorm (eval) folded with identity running stats: gamma=1, beta=0, mean=0, var=1.
    scale = 1.0 / np.sqrt(1.0 + _BN_EPS)
    return w * scale, jnp.zeros((w.shape[0],), jnp.float32)


def make_resnet_params(kg):
    rp = {}
    rp["conv1_w"], rp["conv1_b"] = fold_bn(conv_init(kg, 64, 3, 7))
    layers = []
    for cin, cout, stride in RESNET_CFG:
        blocks = []
        for bi in range(2):
            bcin = cin if bi == 0 else cout
            bstride = stride if bi == 0 else 1
            bp = {}
            bp["w1"], bp["b1"] = fold_bn(conv_init(kg, cout, bcin, 3))
            bp["w2"], bp["b2"] = fold_bn(conv_init(kg, cout, cout, 3))
            if bstride != 1 or bcin != cout:
                bp["wd"], bp["bd"] = fold_bn(conv_init(kg, cout, bcin, 1))
            blocks.append(bp)
        layers.append(blocks)
    rp["layers"] = layers
    return rp


def make_params(kg, num_classes=NUM_CLASSES):
    p = {"resnet": make_resnet_params(kg)}
    p["ec1_w"] = conv_init(kg, 256, 512, 3); p["ec1_b"] = bias_init(kg, 256, 512 * 9)
    p["ec2_w"] = conv_init(kg, 128, 256, 3); p["ec2_b"] = bias_init(kg, 128, 256 * 9)
    p["ec3_w"] = conv_init(kg, 64, 128, 3);  p["ec3_b"] = bias_init(kg, 64, 128 * 9)
    p["fc1_w"], p["fc1_b"] = linear_init(kg, 64 * POOL_HW * POOL_HW, L)
    p["fc2_w"], p["fc2_b"] = linear_init(kg, L, L)
    p["att1_w"], p["att1_b"] = linear_init(kg, L, D)
    p["att2_w"], p["att2_b"] = linear_init(kg, D, K_ATT)
    p["cls_w"], p["cls_b"] = linear_init(kg, L * K_ATT, num_classes)
    return p


def _prep_conv_w(w):
    """PyTorch (Cout,Cin,kh,kw) -> bf16 (kh*kw*Cin, Cout) matching the NHWC tap order
    (i, j, cin) used by both the fused and im2col conv paths."""
    cout, cin, kh, kw = w.shape
    return jnp.transpose(w, (2, 3, 1, 0)).reshape(kh * kw * cin, cout).astype(jnp.bfloat16)


def prepare_params(p):
    """One-time (outside jit) conversion to kernel-friendly layouts and bf16 weights."""
    rp = p["resnet"]
    prep_r = {"conv1_w": _prep_conv_w(rp["conv1_w"]),
              "conv1_b": rp["conv1_b"].astype(jnp.float32)}
    layers = []
    for blocks in rp["layers"]:
        pblocks = []
        for bp in blocks:
            nb = {"w1": _prep_conv_w(bp["w1"]), "b1": bp["b1"].astype(jnp.float32),
                  "w2": _prep_conv_w(bp["w2"]), "b2": bp["b2"].astype(jnp.float32)}
            if "wd" in bp:
                nb["wd"] = _prep_conv_w(bp["wd"])
                nb["bd"] = bp["bd"].astype(jnp.float32)
            pblocks.append(nb)
        layers.append(pblocks)
    prep_r["layers"] = layers

    q = {"resnet": prep_r}
    for name in ("ec1", "ec2", "ec3"):
        q[name + "_w"] = _prep_conv_w(p[name + "_w"])
        q[name + "_b"] = p[name + "_b"].astype(jnp.float32)

    # fc1 rows permuted from PyTorch's NCHW flatten order (c, h, w) to the NHWC flatten
    # order (h, w, c) used by the kernel path -- exact equivalence, zero runtime cost.
    fc1 = p["fc1_w"].reshape(64, POOL_HW, POOL_HW, L).transpose(1, 2, 0, 3)
    q["fc1_w"] = fc1.reshape(64 * POOL_HW * POOL_HW, L).astype(jnp.bfloat16)
    q["fc1_b"] = p["fc1_b"].astype(jnp.float32)
    q["fc2_w"] = p["fc2_w"].astype(jnp.bfloat16)
    q["fc2_b"] = p["fc2_b"].astype(jnp.float32)

    # attention tail: att1 weight streamed as bf16, everything else tiny/f32
    q["att1_w"] = p["att1_w"].astype(jnp.bfloat16)
    q["att1_b"] = p["att1_b"].reshape(1, D).astype(jnp.float32)
    q["att2_wt"] = p["att2_w"].T.reshape(K_ATT, D).astype(jnp.float32)
    q["att2_b"] = p["att2_b"].reshape(1, K_ATT).astype(jnp.float32)
    q["cls_w"] = p["cls_w"].astype(jnp.float32)
    q["cls_b"] = p["cls_b"].reshape(1, -1).astype(jnp.float32)
    return q


# ----------------------------------------------------------------------------
# Forward pass (mirrors Attention.forward), NHWC backbone
# ----------------------------------------------------------------------------
def basic_block(x, bp, stride):
    y = conv2d_pallas(x, bp["w1"], bp["b1"], 3, 3, stride, 1, "relu")
    y = conv2d_pallas(y, bp["w2"], bp["b2"], 3, 3, 1, 1, None)
    if "wd" in bp:
        sc = conv2d_pallas(x, bp["wd"], bp["bd"], 1, 1, stride, 0, None)
    else:
        sc = x
    return jnp.maximum(y + sc, 0.0)


def resnet18_features(x, rp):
    x = conv2d_pallas(x, rp["conv1_w"], rp["conv1_b"], 7, 7, 2, 3, "relu")
    x = lax.reduce_window(x, jnp.array(-jnp.inf, x.dtype), lax.max,
                          (1, 3, 3, 1), (1, 2, 2, 1),
                          padding=((0, 0), (1, 1), (1, 1), (0, 0)))
    for (_, _, stride), blocks in zip(RESNET_CFG, rp["layers"]):
        x = basic_block(x, blocks[0], stride)
        x = basic_block(x, blocks[1], 1)
    return x


def attention_forward(x, params):
    B, bag, C, H, W = x.shape
    # single NCHW -> NHWC conversion at the model boundary, bf16 activations from here on
    # TODO(synk): end-to-end bf16 activations drift slightly vs a pure-f32 torch reference.
    x = x.reshape(B * bag, C, H, W).transpose(0, 2, 3, 1).astype(jnp.bfloat16)

    feats = resnet18_features(x, params["resnet"])                   # (B*bag, h, w, 512)
    feats = adaptive_avg_pool_nhwc(feats, POOL_HW, POOL_HW)          # (B*bag, 30, 30, 512)
    feats = conv2d_pallas(feats, params["ec1_w"], params["ec1_b"], 3, 3, 1, 1, "relu")
    feats = conv2d_pallas(feats, params["ec2_w"], params["ec2_b"], 3, 3, 1, 1, "relu")
    feats = conv2d_pallas(feats, params["ec3_w"], params["ec3_b"], 3, 3, 1, 1, "relu")

    flat = feats.reshape(B * bag, -1)          # NHWC flatten; fc1_w rows pre-permuted to match
    h = matmul_pallas(flat, params["fc1_w"], params["fc1_b"], act="relu",
                      out_dtype=jnp.bfloat16)
    h = matmul_pallas(h, params["fc2_w"], params["fc2_b"], act="relu",
                      out_dtype=jnp.bfloat16)                         # (B*bag, L)

    # fused attention tail: att1 -> tanh -> att2 -> softmax(/0.5) -> bmm -> classifier -> softmax
    logits, probs, A = attention_tail_pallas(h, params, B, bag)
    return logits, probs, A


# ----------------------------------------------------------------------------
if __name__ == "__main__":
    # unit check: Pallas matmul (bf16 operands, f32 accumulation)
    xt = jax.random.normal(jax.random.PRNGKey(2), (16, 256), jnp.float32)
    wt = jax.random.normal(jax.random.PRNGKey(3), (256, 64), jnp.float32)
    bt = jax.random.normal(jax.random.PRNGKey(4), (64,), jnp.float32)
    ref = jnp.maximum(
        jnp.dot(xt.astype(jnp.bfloat16).astype(jnp.float32),
                wt.astype(jnp.bfloat16).astype(jnp.float32)) + bt, 0.0)
    got32 = matmul_pallas(xt, wt, bt, act="relu", out_dtype=jnp.float32)
    np.testing.assert_allclose(np.asarray(got32), np.asarray(ref), rtol=1e-2, atol=1e-2)
    got16 = matmul_pallas(xt, wt, bt, act="relu", out_dtype=jnp.bfloat16)
    np.testing.assert_allclose(np.asarray(got16.astype(jnp.float32)), np.asarray(ref),
                               rtol=5e-2, atol=5e-2)

    # unit check: fused 3x3 stride-1 conv vs XLA conv (same bf16-cast inputs)
    xc = jax.random.normal(jax.random.PRNGKey(5), (2, 8, 8, 128), jnp.float32)
    wc = jax.random.normal(jax.random.PRNGKey(6), (128, 128, 3, 3), jnp.float32) * 0.05
    bc = jax.random.normal(jax.random.PRNGKey(7), (128,), jnp.float32)
    ref_c = lax.conv_general_dilated(
        xc.astype(jnp.bfloat16).astype(jnp.float32),
        jnp.transpose(wc, (2, 3, 1, 0)).astype(jnp.bfloat16).astype(jnp.float32),
        (1, 1), "SAME", dimension_numbers=("NHWC", "HWIO", "NHWC")) + bc
    ref_c = jnp.maximum(ref_c, 0.0)
    got_c = conv2d_pallas(xc, _prep_conv_w(wc), bc, 3, 3, 1, 1, "relu",
                          out_dtype=jnp.float32)
    np.testing.assert_allclose(np.asarray(got_c), np.asarray(ref_c), rtol=2e-2, atol=2e-2)

    kg = KeyGen(0)
    params = prepare_params(make_params(kg, num_classes=NUM_CLASSES))

    # (B, bag_size, C, H, W) -- small bag of RGB images
    x = jax.random.normal(jax.random.PRNGKey(0), (2, 2, 3, 64, 64), jnp.float32)

    forward = jax.jit(attention_forward)
    logits, probs, A = forward(x, params)
    jax.block_until_ready((logits, probs, A))

    assert logits.shape == (2, NUM_CLASSES)
    assert probs.shape == (2, NUM_CLASSES)
    assert A.shape == (2, K_ATT, 2)
    assert bool(jnp.all(jnp.isfinite(logits)))
    np.testing.assert_allclose(np.asarray(probs.sum(axis=1)), np.ones(2), rtol=1e-5, atol=1e-5)
    np.testing.assert_allclose(np.asarray(A.sum(axis=2)), np.ones((2, K_ATT)),
                               rtol=1e-5, atol=1e-5)
    print("KERNEL_OK")
</pallas_src>

<mosaic_0001>
module attributes {stable_mosaic.version = 11 : i64} {
  func.func @_matmul_kernel_single(%arg0: i32, %arg1: i32, %arg2: memref<16x256xbf16, #tpu.memory_space<vmem>>, %arg3: memref<256x64xbf16, #tpu.memory_space<vmem>>, %arg4: memref<1x64xf32, #tpu.memory_space<vmem>>, %arg5: memref<16x64xf32, #tpu.memory_space<vmem>>) attributes {dimension_semantics = [#tpu.dimension_semantics<parallel>, #tpu.dimension_semantics<parallel>], iteration_bounds = array<i64: 1, 1>, scalar_prefetch = 0 : i64, scratch_operands = 0 : i64, tpu.core_type = #tpu.core_type<tc>, window_params = [{transform_indices = @transform_0, window_bounds = array<i64: 16, 256>}, {transform_indices = @transform_1, window_bounds = array<i64: 256, 64>}, {transform_indices = @transform_2, window_bounds = array<i64: 1, 64>}, {transform_indices = @transform_3, window_bounds = array<i64: 16, 64>}]} {
    %c0 = arith.constant 0 : index
    %c0_0 = arith.constant 0 : index
    %0 = vector.load %arg2[%c0, %c0_0] : memref<16x256xbf16, #tpu.memory_space<vmem>>, vector<16x256xbf16>
    %c0_1 = arith.constant 0 : index
    %c0_2 = arith.constant 0 : index
    %1 = vector.load %arg3[%c0_1, %c0_2] : memref<256x64xbf16, #tpu.memory_space<vmem>>, vector<256x64xbf16>
    %cst = arith.constant dense<0.000000e+00> : vector<16x64xf32>
    %2 = tpu.matmul %0, %1, %cst {dimension_numbers = #tpu.dot_dimension_numbers<[1], [0], [0], [1], [0, 0, 1, 1], [], []>} : vector<16x256xbf16>, vector<256x64xbf16>, vector<16x64xf32> -> vector<16x64xf32>
    %c0_3 = arith.constant 0 : index
    %c0_4 = arith.constant 0 : index
    %3 = vector.load %arg4[%c0_3, %c0_4] : memref<1x64xf32, #tpu.memory_space<vmem>>, vector<1x64xf32>
    %4 = vector.broadcast %3 : vector<1x64xf32> to vector<16x64xf32>
    %5 = arith.addf %2, %4 : vector<16x64xf32>
    %cst_5 = arith.constant 0.000000e+00 : f32
    %6 = vector.broadcast %cst_5 : f32 to vector<16x64xf32>
    %7 = arith.maximumf %5, %6 : vector<16x64xf32>
    %c0_6 = arith.constant 0 : index
    %c0_7 = arith.constant 0 : index
    %8 = vector.load %arg5[%c0_6, %c0_7] : memref<16x64xf32, #tpu.memory_space<vmem>>, vector<16x64xf32>
    tpu.vector_store %arg5[%c0_6, %c0_7], %7 {strides = array<i32>} : memref<16x64xf32, #tpu.memory_space<vmem>>, vector<16x64xf32>,
    return
  }
  func.func @transform_0(%arg0: i32, %arg1: i32) -> (i32, i32) {
    %c0_i32 = arith.constant 0 : i32
    %c0_i32_0 = arith.constant 0 : i32
    return %arg1, %c0_i32 : i32, i32
  }
  func.func @transform_1(%arg0: i32, %arg1: i32) -> (i32, i32) {
    %c0_i32 = arith.constant 0 : i32
    %c0_i32_0 = arith.constant 0 : i32
    return %c0_i32, %arg0 : i32, i32
  }
  func.func @transform_2(%arg0: i32, %arg1: i32) -> (i32, i32) {
    %c0_i32 = arith.constant 0 : i32
    %c0_i32_0 = arith.constant 0 : i32
    return %c0_i32, %arg0 : i32, i32
  }
  func.func @transform_3(%arg0: i32, %arg1: i32) -> (i32, i32) {
    %c0_i32 = arith.constant 0 : i32
    return %arg1, %arg0 : i32, i32
  }
}

</mosaic_0001>

<llo_original>
// kernel: tpu_custom_call.1
$region0: #{tpu_custom_call.1}
  #allocation0 [shape = 'u32[]', space=smem, size = 0x4, offset = 0x4, fixed_abs, tag = 'smem constant byte address 0x4 - core index']
  #allocation1 [shape = 'u32[144,128]{1,0:T(1,128)}', space=vmem, size = 0x12000, scoped, tag = 'internal scratch']
  %s0 = inlined_call_operand.vmem [shape: bf16[16,256], index: 0, kind: input, shape index: {}]
  %s1 = inlined_call_operand.vmem [shape: bf16[256,64], index: 1, kind: input, shape index: {}]
  %s2 = inlined_call_operand.vmem [shape: f32[1,64], index: 2, kind: input, shape index: {}]
  %s3 = inlined_call_operand.hbm [shape: f32[16,64], index: 3, kind: output, shape index: {}]
  %s4 = sld [smem:[#allocation0]]
  $region22: #{tpu_custom_call.1} parent=0
    _
  %s6 = ssub.s32 1, %s4
  %s7 = scalar_select 0, %s6, %s4
  $region1: #{tpu_custom_call.1} parent=0
    #allocation2 [shape = 'u8[8192]{0}', space=vmem, size = 0x2000, scoped, tag = 'output window, operand 0, single buffered']
    #allocation3 [shape = 's32[1]{0}', space=sflag, size = 0x4, scoped, tag = 'scoped memory for tpu_custom_call.1']
    %8 = vsyncpa [#allocation3], 0
    // Predicated region
    $region2: #{tpu_custom_call.1} parent=1 // pred_check
      _
    $region3: #{tpu_custom_call.1} parent=1 // pred_check_branch
      %10 = sbr.rel (0) target = $region5
    $region4: #{tpu_custom_call.1} parent=1 // pred_region
      _
    $region5: #{tpu_custom_call.1} parent=1 // pred_fallthru
      _
    // Predicated region
    $region6: #{tpu_custom_call.1} parent=1 // pred_check
      _
    $region7: #{tpu_custom_call.1} parent=1 // pred_check_branch
      %12 = sbr.rel (0) target = $region9
    $region8: #{tpu_custom_call.1} parent=1 // pred_region
      _
    $region9: #{tpu_custom_call.1} parent=1 // pred_fallthru
      _
    // Predicated region
    $region10: #{tpu_custom_call.1} parent=1 // pred_check
      _
    $region11: #{tpu_custom_call.1} parent=1 // pred_check_branch
      %14 = sbr.rel (0) target = $region13
    $region12: #{tpu_custom_call.1} parent=1 // pred_region
      _
    $region13: #{tpu_custom_call.1} parent=1 // pred_fallthru
      _
    %v16 = vld [vmem:[%s0] sm:$0xff]
    %v17 = vld [vmem:[%s0 + $0x8] sm:$0xff]
    %v18 = vld [vmem:[%s1] sm:$0xf]
    %v19 = vld [vmem:[%s1 + $0x4] sm:$0xf]
    %v20 = vld [vmem:[%s1 + $0x8] sm:$0xf]
    %v21 = vld [vmem:[%s1 + $0xc] sm:$0xf]
    %v22 = vld [vmem:[%s1 + $0x10] sm:$0xf]
    %v23 = vld [vmem:[%s1 + $0x14] sm:$0xf]
    %v24 = vld [vmem:[%s1 + $0x18] sm:$0xf]
    %v25 = vld [vmem:[%s1 + $0x1c] sm:$0xf]
    %v26 = vld [vmem:[%s1 + $0x20] sm:$0xf]
    %v27 = vld [vmem:[%s1 + $0x24] sm:$0xf]
    %v28 = vld [vmem:[%s1 + $0x28] sm:$0xf]
    %v29 = vld [vmem:[%s1 + $0x2c] sm:$0xf]
    %v30 = vld [vmem:[%s1 + $0x30] sm:$0xf]
    %v31 = vld [vmem:[%s1 + $0x34] sm:$0xf]
    %v32 = vld [vmem:[%s1 + $0x38] sm:$0xf]
    %v33 = vld [vmem:[%s1 + $0x3c] sm:$0xf]
    %v34 = vld [vmem:[%s1 + $0x40] sm:$0xf]
    %v35 = vld [vmem:[%s1 + $0x44] sm:$0xf]
    %v36 = vld [vmem:[%s1 + $0x48] sm:$0xf]
    %v37 = vld [vmem:[%s1 + $0x4c] sm:$0xf]
    %v38 = vld [vmem:[%s1 + $0x50] sm:$0xf]
    %v39 = vld [vmem:[%s1 + $0x54] sm:$0xf]
    %v40 = vld [vmem:[%s1 + $0x58] sm:$0xf]
    %v41 = vld [vmem:[%s1 + $0x5c] sm:$0xf]
    %v42 = vld [vmem:[%s1 + $0x60] sm:$0xf]
    %v43 = vld [vmem:[%s1 + $0x64] sm:$0xf]
    %v44 = vld [vmem:[%s1 + $0x68] sm:$0xf]
    %v45 = vld [vmem:[%s1 + $0x6c] sm:$0xf]
    %v46 = vld [vmem:[%s1 + $0x70] sm:$0xf]
    %v47 = vld [vmem:[%s1 + $0x74] sm:$0xf]
    %v48 = vld [vmem:[%s1 + $0x78] sm:$0xf]
    %v49 = vld [vmem:[%s1 + $0x7c] sm:$0xf]
    %v50 = vld [vmem:[%s2] sm:$0x1]
    %v52 = vlaneseq
    %v53 = vshrl.u32 %v52, 7
    %v54 = vsub.s32 0, %v53
    %v55 = vrot.slane %v50, %v54
    %v59 = vunpack.c.l.b16 %v16
    %v60 = vunpack.c.h.b16 %v16
    %v61 = vunpack.c.l.b16 %v17
    %v62 = vunpack.c.h.b16 %v17
    %v63 = vpack.c.b16 %v61, %v59
    %v64 = vpack.c.b16 %v62, %v60
    %v99 = vunpack.c.l.b16 %v18
    %v100 = vunpack.c.l.b16 %v19
    %v101 = vunpack.c.l.b16 %v20
    %v102 = vunpack.c.l.b16 %v21
    %v103 = vunpack.c.l.b16 %v22
    %v104 = vunpack.c.l.b16 %v23
    %v105 = vunpack.c.l.b16 %v24
    %v106 = vunpack.c.l.b16 %v25
    %v107 = vunpack.c.l.b16 %v26
    %v108 = vunpack.c.l.b16 %v27
    %v109 = vunpack.c.l.b16 %v28
    %v110 = vunpack.c.l.b16 %v29
    %v111 = vunpack.c.l.b16 %v30
    %v112 = vunpack.c.l.b16 %v31
    %v113 = vunpack.c.l.b16 %v32
    %v114 = vunpack.c.l.b16 %v33
    %v115 = vunpack.c.l.b16 %v34
    %v116 = vunpack.c.l.b16 %v35
    %v117 = vunpack.c.l.b16 %v36
    %v118 = vunpack.c.l.b16 %v37
    %v119 = vunpack.c.l.b16 %v38
    %v120 = vunpack.c.l.b16 %v39
    %v121 = vunpack.c.l.b16 %v40
    %v122 = vunpack.c.l.b16 %v41
    %v123 = vunpack.c.l.b16 %v42
    %v124 = vunpack.c.l.b16 %v43
    %v125 = vunpack.c.l.b16 %v44
    %v126 = vunpack.c.l.b16 %v45
    %v127 = vunpack.c.l.b16 %v46
    %v128 = vunpack.c.l.b16 %v47
    %v129 = vunpack.c.l.b16 %v48
    %v130 = vunpack.c.l.b16 %v49
    %v131 = vpack.c.b16 %v100, %v99
    %v132 = vpack.c.b16 %v102, %v101
    %v133 = vpack.c.b16 %v104, %v103
    %v134 = vpack.c.b16 %v106, %v105
    %v135 = vpack.c.b16 %v108, %v107
    %v136 = vpack.c.b16 %v110, %v109
    %v137 = vpack.c.b16 %v112, %v111
    %v138 = vpack.c.b16 %v114, %v113
    %v139 = vpack.c.b16 %v116, %v115
    %v140 = vpack.c.b16 %v118, %v117
    %v141 = vpack.c.b16 %v120, %v119
    %v142 = vpack.c.b16 %v122, %v121
    %v143 = vpack.c.b16 %v124, %v123
    %v144 = vpack.c.b16 %v126, %v125
    %v145 = vpack.c.b16 %v128, %v127
    %v146 = vpack.c.b16 %v130, %v129
    %163 = vmatprep.subr.bf16.mxu0 0
    %164 = vmatpush1.bf16.msra.mxu0 %v131
    %165 = vmatprep.subr.bf16.mxu0 0
    %166 = vmatpush1.bf16.msra.mxu0 %v132
    %167 = vmatprep.subr.bf16.mxu0 0
    %168 = vmatpush1.bf16.msra.mxu0 %v133
    %169 = vmatprep.subr.bf16.mxu0 0
    %170 = vmatpush1.bf16.msra.mxu0 %v134
    %171 = vmatprep.subr.bf16.mxu0 0
    %172 = vmatpush1.bf16.msra.mxu0 %v135
    %173 = vmatprep.subr.bf16.mxu0 0
    %174 = vmatpush1.bf16.msra.mxu0 %v136
    %175 = vmatprep.subr.bf16.mxu0 0
    %176 = vmatpush1.bf16.msra.mxu0 %v137
    %177 = vmatprep.subr.bf16.mxu0 0
    %178 = vmatpush1.bf16.msra.mxu0 %v138
    %179 = vmatprep.subr.bf16.mxu0 0
    %180 = vmatpush1.bf16.msra.mxu0 %v139
    %181 = vmatprep.subr.bf16.mxu0 0
    %182 = vmatpush1.bf16.msra.mxu0 %v140
    %183 = vmatprep.subr.bf16.mxu0 0
    %184 = vmatpush1.bf16.msra.mxu0 %v141
    %185 = vmatprep.subr.bf16.mxu0 0
    %186 = vmatpush1.bf16.msra.mxu0 %v142
    %187 = vmatprep.subr.bf16.mxu0 0
    %188 = vmatpush1.bf16.msra.mxu0 %v143
    %189 = vmatprep.subr.bf16.mxu0 0
    %190 = vmatpush1.bf16.msra.mxu0 %v144
    %191 = vmatprep.subr.bf16.mxu0 0
    %192 = vmatpush1.bf16.msra.mxu0 %v145
    %193 = vmatprep.subr.bf16.mxu0 0
    %194 = vmatpush1.bf16.msra.mxu0 %v146
    %195 = vmatprep.mubr.bf16.mxu0 %v64
    %196 = vmatmul.mubr.bf16.gmra.mrb[0].mxu0 %v63
    %v197 = vpop.f32.mrb[0].mxu0
    %v198 = vadd.f32 %v55, %v197
    %v199 = vpop.f32.mrb[0].mxu0
    %v200 = vpop.f32.mrb[0].mxu0
    %v201 = vadd.f32 %v55, %v200
    %v202 = vpop.f32.mrb[0].mxu0
    %203 = vdwg.mxu0
    %v204 = vmax.f32 %v198, 0.0
    %v205 = vmax.f32 %v201, 0.0
    %vm206 = vcmask 523264
    %207 = vst.msk [vmem:[#allocation2] sm:$0xff] %vm206, %v204
    %208 = vst.msk [vmem:[#allocation2 + $0x8] sm:$0xff] %vm206, %v205
    // Predicated region
    $region14: #{tpu_custom_call.1} parent=1 // pred_check
      _
    $region15: #{tpu_custom_call.1} parent=1 // pred_check_branch
      %210 = sbr.rel (0) target = $region17
    $region16: #{tpu_custom_call.1} parent=1 // pred_region
      %s212 = ssub.s32 256, 256
      %213 = vsyncadd [#allocation3], %s212
      %s214 = sshll.u32 [#allocation2], 4
      %s215 = int_to_ptr.vmem [resolvable:$true] %s214
      %220 = dma.vmem_to_hbm [thread:$0]  %s215, 256, %s3, [#allocation3], 128, 128, 8
    $region17: #{tpu_custom_call.1} parent=1 // pred_fallthru
      _
    // Predicated region
    $region18: #{tpu_custom_call.1} parent=1 // pred_check
      _
    $region19: #{tpu_custom_call.1} parent=1 // pred_check_branch
      %222 = sbr.rel (0) target = $region21
    $region20: #{tpu_custom_call.1} parent=1 // pred_region
      %223 = dma.done [#allocation3], 256
    $region21: #{tpu_custom_call.1} parent=1 // pred_fallthru
      _
    %224 = vsyncpa [#allocation3], 1

</llo_original>
